<compile_context>
chip_gen: v7x
topology: tpu7x:2x2x1
jax: 0.10.0
libtpu: 0.0.40
codegen_flags: <defaults>
</compile_context>

<pallas_src>
import functools

import jax
import jax.numpy as jnp
from jax.experimental import pallas as pl
from jax.experimental.pallas import tpu as pltpu

LANE = 128


def _round_up(x, m):
    return ((x + m - 1) // m) * m


def actor_kernel(x_ref, w1_ref, b1_ref, w2_ref, b2_ref, w3_ref, b3_ref, o_ref):
    # fc1 + bias + ReLU (bf16 streaming, f32 accumulation, bf16 live value)
    h1 = jnp.dot(x_ref[...], w1_ref[...], preferred_element_type=jnp.float32)
    h1 = jnp.maximum(h1 + b1_ref[...], 0.0).astype(w2_ref.dtype)
    # fc2 + bias + ReLU
    h2 = jnp.dot(h1, w2_ref[...], preferred_element_type=jnp.float32)
    h2 = jnp.maximum(h2 + b2_ref[...], 0.0).astype(w3_ref.dtype)
    # fc3 logits over the lane-padded action dim; padded lanes carry b3=-1e9.
    logits = jnp.dot(h2, w3_ref[...], preferred_element_type=jnp.float32)
    logits = logits + b3_ref[...]
    # Softmax over the action dim (padded lanes underflow to 0 after exp).
    m = jnp.max(logits, axis=-1, keepdims=True)
    e = jnp.exp(logits - m)
    denom = jnp.sum(e, axis=-1, keepdims=True)
    o_ref[...] = (e / denom).astype(o_ref.dtype)   # exact: rows sum to 1


def prepare_actor_params(params, *, compute_dtype=jnp.bfloat16):
    """One-time (outside the hot path) weight prep: bf16 cast + lane padding.

    Returns (w1,b1,w2,b2,w3p,b3p) with weights in bf16, biases in f32, and the
    action dimension of w3/b3 padded to a multiple of 128.  Padded b3 entries
    are -1e9 so the in-kernel softmax assigns them zero probability.
    """
    w1, b1, w2, b2, w3, b3 = params
    action_dims = w3.shape[1]
    action_pad = _round_up(max(action_dims, LANE), LANE)
    pad = action_pad - action_dims
    w3p = jnp.pad(w3, ((0, 0), (0, pad)))
    b3p = jnp.pad(b3, ((0, 0), (0, pad)), constant_values=-1e9)
    return (w1.astype(compute_dtype), b1.astype(jnp.float32),
            w2.astype(compute_dtype), b2.astype(jnp.float32),
            w3p.astype(compute_dtype), b3p.astype(jnp.float32))


@functools.partial(jax.jit, static_argnames=("action_dims", "tb"))
def actor_forward(s, prepared_params, *, action_dims, tb=512):
    """Forward pass.  `prepared_params` must come from prepare_actor_params."""
    w1, b1, w2, b2, w3, b3 = prepared_params
    batch, state_dims = s.shape
    action_pad = w3.shape[1]

    s_c = s.astype(w1.dtype)

    # Batch tiling: multiple of 16 (bf16 sublane packing), capped at `tb`.
    padded16 = _round_up(batch, 16)
    tile = max(16, min(tb, padded16))
    # v7x megacore: if everything fits one tile but we can split into >=2
    # tiles of >=128 rows (MXU/v5e-friendly M), do so -> grid of >=2 parallel
    # steps so both TensorCores get work.  Harmless on v5e/v6e (1 TC).
    if padded16 <= tile and padded16 >= 256:
        tile = max(128, (padded16 // 2) // 128 * 128)
    padded = _round_up(batch, tile)
    if padded != batch:
        s_c = jnp.pad(s_c, ((0, padded - batch), (0, 0)))
    grid = (padded // tile,)

    def resident(shape):
        # Same block index every grid step -> stays VMEM-resident (no re-DMA).
        return pl.BlockSpec(shape, lambda i: (0, 0))

    out = pl.pallas_call(
        actor_kernel,
        out_shape=jax.ShapeDtypeStruct((padded, action_pad), jnp.float32),
        grid=grid,
        in_specs=[
            pl.BlockSpec((tile, state_dims), lambda i: (i, 0)),
            resident(w1.shape), resident(b1.shape),
            resident(w2.shape), resident(b2.shape),
            resident(w3.shape), resident(b3.shape),
        ],
        out_specs=pl.BlockSpec((tile, action_pad), lambda i: (i, 0)),
        compiler_params=pltpu.CompilerParams(
            dimension_semantics=("parallel",),   # megacore sharding on v7x
        ),
    )(s_c, w1, b1, w2, b2, w3, b3)

    return out[:batch, :action_dims]


def init_actor_params(key, state_dims, action_dims, hidden_dims=256):
    """Deterministic init matching the PyTorch module:
    orthogonal weights (on the [out, in] matrix, then transposed), zero bias."""
    k1, k2, k3 = jax.random.split(key, 3)
    ortho = jax.nn.initializers.orthogonal()
    # PyTorch nn.Linear weight is [out, in]; orthogonal_ applies to that shape.
    w1 = ortho(k1, (hidden_dims, state_dims), jnp.float32).T
    w2 = ortho(k2, (hidden_dims, hidden_dims), jnp.float32).T
    w3 = ortho(k3, (action_dims, hidden_dims), jnp.float32).T
    b1 = jnp.zeros((1, hidden_dims), jnp.float32)
    b2 = jnp.zeros((1, hidden_dims), jnp.float32)
    b3 = jnp.zeros((1, action_dims), jnp.float32)
    return (w1, b1, w2, b2, w3, b3)


if __name__ == "__main__":
    # Small shapes consistent with the module's forward (batch, state_dims).
    batch = 2
    state_dims = 16
    hidden_dims = 32
    action_dims = 8

    key = jax.random.PRNGKey(0)
    k_params, k_input = jax.random.split(key)

    params = init_actor_params(k_params, state_dims, action_dims, hidden_dims)
    s = jax.random.normal(k_input, (batch, state_dims), jnp.float32)

    # One-time weight preparation (bf16 cast + action-dim lane padding).
    prepared = prepare_actor_params(params)
    prepared = jax.block_until_ready(prepared)

    out = actor_forward(s, prepared, action_dims=action_dims)
    out = jax.block_until_ready(out)

    # Reference in plain JAX with matching bf16 streaming / f32 accumulation.
    w1, b1, w2, b2, w3, b3 = params
    bf = jnp.bfloat16
    h = jnp.maximum(
        jnp.dot(s.astype(bf), w1.astype(bf), preferred_element_type=jnp.float32)
        + b1, 0.0)
    h = jnp.maximum(
        jnp.dot(h.astype(bf), w2.astype(bf), preferred_element_type=jnp.float32)
        + b2, 0.0)
    logits = jnp.dot(h.astype(bf), w3.astype(bf),
                     preferred_element_type=jnp.float32) + b3
    ref = jax.nn.softmax(logits, axis=-1)

    assert out.shape == (batch, action_dims)
    # bf16 streaming vs. the reference (same casts) -> tight agreement; the
    # bf16 path itself deviates from a pure-f32 torch Actor at ~1e-2 rel.
    assert jnp.allclose(out, ref, atol=2e-3, rtol=2e-3), (out, ref)
    # Exact reciprocal in the kernel -> rows sum to 1 up to f32 rounding.
    assert jnp.allclose(jnp.sum(out, axis=-1), 1.0, atol=1e-4)

    print("KERNEL_OK")
</pallas_src>

<mosaic_0001>
module attributes {stable_mosaic.version = 11 : i64} {
  func.func @actor_kernel(%arg0: i32, %arg1: memref<16x16xbf16, #tpu.memory_space<vmem>>, %arg2: memref<16x32xbf16, #tpu.memory_space<vmem>>, %arg3: memref<1x32xf32, #tpu.memory_space<vmem>>, %arg4: memref<32x32xbf16, #tpu.memory_space<vmem>>, %arg5: memref<1x32xf32, #tpu.memory_space<vmem>>, %arg6: memref<32x128xbf16, #tpu.memory_space<vmem>>, %arg7: memref<1x128xf32, #tpu.memory_space<vmem>>, %arg8: memref<16x128xf32, #tpu.memory_space<vmem>>) attributes {dimension_semantics = [#tpu.dimension_semantics<parallel>], iteration_bounds = array<i64: 1>, scalar_prefetch = 0 : i64, scratch_operands = 0 : i64, tpu.core_type = #tpu.core_type<tc>, window_params = [{transform_indices = @transform_0, window_bounds = array<i64: 16, 16>}, {pipeline_mode = #tpu.pipeline_mode<synchronous>, transform_indices = @transform_1, window_bounds = array<i64: 16, 32>}, {pipeline_mode = #tpu.pipeline_mode<synchronous>, transform_indices = @transform_2, window_bounds = array<i64: 1, 32>}, {pipeline_mode = #tpu.pipeline_mode<synchronous>, transform_indices = @transform_3, window_bounds = array<i64: 32, 32>}, {pipeline_mode = #tpu.pipeline_mode<synchronous>, transform_indices = @transform_4, window_bounds = array<i64: 1, 32>}, {pipeline_mode = #tpu.pipeline_mode<synchronous>, transform_indices = @transform_5, window_bounds = array<i64: 32, 128>}, {pipeline_mode = #tpu.pipeline_mode<synchronous>, transform_indices = @transform_6, window_bounds = array<i64: 1, 128>}, {transform_indices = @transform_7, window_bounds = array<i64: 16, 128>}]} {
    %c0 = arith.constant 0 : index
    %c0_0 = arith.constant 0 : index
    %0 = vector.load %arg1[%c0, %c0_0] : memref<16x16xbf16, #tpu.memory_space<vmem>>, vector<16x16xbf16>
    %c0_1 = arith.constant 0 : index
    %c0_2 = arith.constant 0 : index
    %1 = vector.load %arg2[%c0_1, %c0_2] : memref<16x32xbf16, #tpu.memory_space<vmem>>, vector<16x32xbf16>
    %cst = arith.constant dense<0.000000e+00> : vector<16x32xf32>
    %2 = tpu.matmul %0, %1, %cst {dimension_numbers = #tpu.dot_dimension_numbers<[1], [0], [0], [1], [0, 0, 1, 1], [], []>} : vector<16x16xbf16>, vector<16x32xbf16>, vector<16x32xf32> -> vector<16x32xf32>
    %c0_3 = arith.constant 0 : index
    %c0_4 = arith.constant 0 : index
    %3 = vector.load %arg3[%c0_3, %c0_4] : memref<1x32xf32, #tpu.memory_space<vmem>>, vector<1x32xf32>
    %4 = vector.broadcast %3 : vector<1x32xf32> to vector<16x32xf32>
    %5 = arith.addf %2, %4 : vector<16x32xf32>
    %cst_5 = arith.constant 0.000000e+00 : f32
    %6 = vector.broadcast %cst_5 : f32 to vector<16x32xf32>
    %7 = arith.maximumf %5, %6 : vector<16x32xf32>
    %8 = arith.truncf %7 : vector<16x32xf32> to vector<16x32xbf16>
    %c0_6 = arith.constant 0 : index
    %c0_7 = arith.constant 0 : index
    %9 = vector.load %arg4[%c0_6, %c0_7] : memref<32x32xbf16, #tpu.memory_space<vmem>>, vector<32x32xbf16>
    %cst_8 = arith.constant dense<0.000000e+00> : vector<16x32xf32>
    %10 = tpu.matmul %8, %9, %cst_8 {dimension_numbers = #tpu.dot_dimension_numbers<[1], [0], [0], [1], [0, 0, 1, 1], [], []>} : vector<16x32xbf16>, vector<32x32xbf16>, vector<16x32xf32> -> vector<16x32xf32>
    %c0_9 = arith.constant 0 : index
    %c0_10 = arith.constant 0 : index
    %11 = vector.load %arg5[%c0_9, %c0_10] : memref<1x32xf32, #tpu.memory_space<vmem>>, vector<1x32xf32>
    %12 = vector.broadcast %11 : vector<1x32xf32> to vector<16x32xf32>
    %13 = arith.addf %10, %12 : vector<16x32xf32>
    %cst_11 = arith.constant 0.000000e+00 : f32
    %14 = vector.broadcast %cst_11 : f32 to vector<16x32xf32>
    %15 = arith.maximumf %13, %14 : vector<16x32xf32>
    %16 = arith.truncf %15 : vector<16x32xf32> to vector<16x32xbf16>
    %c0_12 = arith.constant 0 : index
    %c0_13 = arith.constant 0 : index
    %17 = vector.load %arg6[%c0_12, %c0_13] : memref<32x128xbf16, #tpu.memory_space<vmem>>, vector<32x128xbf16>
    %cst_14 = arith.constant dense<0.000000e+00> : vector<16x128xf32>
    %18 = tpu.matmul %16, %17, %cst_14 {dimension_numbers = #tpu.dot_dimension_numbers<[1], [0], [0], [1], [0, 0, 1, 1], [], []>} : vector<16x32xbf16>, vector<32x128xbf16>, vector<16x128xf32> -> vector<16x128xf32>
    %c0_15 = arith.constant 0 : index
    %c0_16 = arith.constant 0 : index
    %19 = vector.load %arg7[%c0_15, %c0_16] : memref<1x128xf32, #tpu.memory_space<vmem>>, vector<1x128xf32>
    %20 = vector.broadcast %19 : vector<1x128xf32> to vector<16x128xf32>
    %21 = arith.addf %18, %20 : vector<16x128xf32>
    %cst_17 = arith.constant dense<0xFF800000> : vector<16xf32>
    %22 = vector.multi_reduction <maximumf>, %21, %cst_17 [1] : vector<16x128xf32> to vector<16xf32>
    %23 = vector.shape_cast %22 : vector<16xf32> to vector<16x1xf32>
    %24 = vector.broadcast %23 : vector<16x1xf32> to vector<16x128xf32>
    %25 = arith.subf %21, %24 : vector<16x128xf32>
    %26 = math.exp %25 : vector<16x128xf32>
    %cst_18 = arith.constant dense<0.000000e+00> : vector<16xf32>
    %27 = vector.multi_reduction <add>, %26, %cst_18 [1] : vector<16x128xf32> to vector<16xf32>
    %28 = vector.shape_cast %27 : vector<16xf32> to vector<16x1xf32>
    %29 = vector.broadcast %28 : vector<16x1xf32> to vector<16x128xf32>
    %30 = arith.divf %26, %29 : vector<16x128xf32>
    %c0_19 = arith.constant 0 : index
    %c0_20 = arith.constant 0 : index
    %31 = vector.load %arg8[%c0_19, %c0_20] : memref<16x128xf32, #tpu.memory_space<vmem>>, vector<16x128xf32>
    tpu.vector_store %arg8[%c0_19, %c0_20], %30 {strides = array<i32>} : memref<16x128xf32, #tpu.memory_space<vmem>>, vector<16x128xf32>,
    return
  }
  func.func @transform_0(%arg0: i32) -> (i32, i32) {
    %c0_i32 = arith.constant 0 : i32
    %c0_i32_0 = arith.constant 0 : i32
    return %arg0, %c0_i32 : i32, i32
  }
  func.func @transform_1(%arg0: i32) -> (i32, i32) {
    %c0_i32 = arith.constant 0 : i32
    %c0_i32_0 = arith.constant 0 : i32
    %c0_i32_1 = arith.constant 0 : i32
    return %c0_i32, %c0_i32_0 : i32, i32
  }
  func.func @transform_2(%arg0: i32) -> (i32, i32) {
    %c0_i32 = arith.constant 0 : i32
    %c0_i32_0 = arith.constant 0 : i32
    %c0_i32_1 = arith.constant 0 : i32
    return %c0_i32, %c0_i32_0 : i32, i32
  }
  func.func @transform_3(%arg0: i32) -> (i32, i32) {
    %c0_i32 = arith.constant 0 : i32
    %c0_i32_0 = arith.constant 0 : i32
    %c0_i32_1 = arith.constant 0 : i32
    return %c0_i32, %c0_i32_0 : i32, i32
  }
  func.func @transform_4(%arg0: i32) -> (i32, i32) {
    %c0_i32 = arith.constant 0 : i32
    %c0_i32_0 = arith.constant 0 : i32
    %c0_i32_1 = arith.constant 0 : i32
    return %c0_i32, %c0_i32_0 : i32, i32
  }
  func.func @transform_5(%arg0: i32) -> (i32, i32) {
    %c0_i32 = arith.constant 0 : i32
    %c0_i32_0 = arith.constant 0 : i32
    %c0_i32_1 = arith.constant 0 : i32
    return %c0_i32, %c0_i32_0 : i32, i32
  }
  func.func @transform_6(%arg0: i32) -> (i32, i32) {
    %c0_i32 = arith.constant 0 : i32
    %c0_i32_0 = arith.constant 0 : i32
    %c0_i32_1 = arith.constant 0 : i32
    return %c0_i32, %c0_i32_0 : i32, i32
  }
  func.func @transform_7(%arg0: i32) -> (i32, i32) {
    %c0_i32 = arith.constant 0 : i32
    %c0_i32_0 = arith.constant 0 : i32
    return %arg0, %c0_i32 : i32, i32
  }
}

</mosaic_0001>

<llo_original>
// kernel: actor_forward.1
$region0: #{actor_forward.1}
  #allocation0 [shape = 'u32[]', space=smem, size = 0x4, offset = 0x4, fixed_abs, tag = 'smem constant byte address 0x4 - core index']
  #allocation1 [shape = 'u32[144,128]{1,0:T(1,128)}', space=vmem, size = 0x12000, scoped, tag = 'internal scratch']
  %s0 = inlined_call_operand.vmem [shape: bf16[16,16], index: 0, kind: input, shape index: {}]
  %s1 = inlined_call_operand.hbm [shape: bf16[16,32], index: 1, kind: input, shape index: {}]
  %s2 = inlined_call_operand.hbm [shape: f32[1,32], index: 2, kind: input, shape index: {}]
  %s3 = inlined_call_operand.vmem [shape: bf16[32,32], index: 3, kind: input, shape index: {}]
  %s4 = inlined_call_operand.hbm [shape: f32[1,32], index: 4, kind: input, shape index: {}]
  %s5 = inlined_call_operand.vmem [shape: bf16[32,128], index: 5, kind: input, shape index: {}]
  %s6 = inlined_call_operand.vmem [shape: f32[1,128], index: 6, kind: input, shape index: {}]
  %s7 = inlined_call_operand.vmem [shape: f32[16,128], index: 7, kind: output, shape index: {}]
  %s8 = sld [smem:[#allocation0]]
  $region50: #{actor_forward.1} parent=0
    _
  %s10 = ssub.s32 1, %s8
  %s11 = scalar_select 0, %s10, %s8
  $region1: #{actor_forward.1} parent=0
    #allocation2 [shape = 'u8[4096]{0}', space=vmem, size = 0x1000, scoped, tag = 'input window, operand 1, single buffered']
    #allocation3 [shape = 's32[1]{0}', space=sflag, size = 0x4, scoped, tag = 'scoped memory for actor_forward.1']
    #allocation4 [shape = 'u8[512]{0}', space=vmem, size = 0x400, scoped, tag = 'input window, operand 2, single buffered']
    #allocation5 [shape = 's32[1]{0}', space=sflag, size = 0x4, scoped, tag = 'scoped memory for actor_forward.1']
    #allocation6 [shape = 'u8[512]{0}', space=vmem, size = 0x400, scoped, tag = 'input window, operand 4, single buffered']
    %12 = vsyncpa [#allocation3], 0
    %13 = vsyncpa [#allocation5], 0
    // Predicated region
    $region2: #{actor_forward.1} parent=1 // pred_check
      _
    $region3: #{actor_forward.1} parent=1 // pred_check_branch
      %15 = sbr.rel (0) target = $region5
    $region4: #{actor_forward.1} parent=1 // pred_region
      _
    $region5: #{actor_forward.1} parent=1 // pred_fallthru
      _
    // Predicated region
    $region6: #{actor_forward.1} parent=1 // pred_check
      _
    $region7: #{actor_forward.1} parent=1 // pred_check_branch
      %17 = sbr.rel (0) target = $region9
    $region8: #{actor_forward.1} parent=1 // pred_region
      %s19 = ssub.s32 128, 128
      %20 = vsyncadd [#allocation3], %s19
      %s21 = sshll.u32 [#allocation2], 4
      %s22 = int_to_ptr.vmem [resolvable:$true] %s21
      %27 = dma.hbm_to_vmem [thread:$0]  %s1, 128, %s22, [#allocation3], 64, 64, 4
    $region9: #{actor_forward.1} parent=1 // pred_fallthru
      _
    // Predicated region
    $region10: #{actor_forward.1} parent=1 // pred_check
      _
    $region11: #{actor_forward.1} parent=1 // pred_check_branch
      %29 = sbr.rel (0) target = $region13
    $region12: #{actor_forward.1} parent=1 // pred_region
      %s31 = ssub.s32 16, 16
      %32 = vsyncadd [#allocation5], %s31
      %s34 = sshll.u32 [#allocation4], 4
      %s35 = int_to_ptr.vmem [resolvable:$true] %s34
      %37 = dma.hbm_to_vmem [thread:$0]  %s2, 16, %s35, [#allocation5]
    $region13: #{actor_forward.1} parent=1 // pred_fallthru
      _
    // Predicated region
    $region14: #{actor_forward.1} parent=1 // pred_check
      _
    $region15: #{actor_forward.1} parent=1 // pred_check_branch
      %39 = sbr.rel (0) target = $region17
    $region16: #{actor_forward.1} parent=1 // pred_region
      _
    $region17: #{actor_forward.1} parent=1 // pred_fallthru
      _
    // Predicated region
    $region18: #{actor_forward.1} parent=1 // pred_check
      _
    $region19: #{actor_forward.1} parent=1 // pred_check_branch
      %41 = sbr.rel (0) target = $region21
    $region20: #{actor_forward.1} parent=1 // pred_region
      %s43 = ssub.s32 16, 16
      %44 = vsyncadd [#allocation5], %s43
      %s46 = sshll.u32 [#allocation6], 4
      %s47 = int_to_ptr.vmem [resolvable:$true] %s46
      %49 = dma.hbm_to_vmem [thread:$0]  %s4, 16, %s47, [#allocation5]
    $region21: #{actor_forward.1} parent=1 // pred_fallthru
      _
    // Predicated region
    $region22: #{actor_forward.1} parent=1 // pred_check
      _
    $region23: #{actor_forward.1} parent=1 // pred_check_branch
      %51 = sbr.rel (0) target = $region25
    $region24: #{actor_forward.1} parent=1 // pred_region
      _
    $region25: #{actor_forward.1} parent=1 // pred_fallthru
      _
    // Predicated region
    $region26: #{actor_forward.1} parent=1 // pred_check
      _
    $region27: #{actor_forward.1} parent=1 // pred_check_branch
      %53 = sbr.rel (0) target = $region29
    $region28: #{actor_forward.1} parent=1 // pred_region
      _
    $region29: #{actor_forward.1} parent=1 // pred_fallthru
      _
    // Predicated region
    $region30: #{actor_forward.1} parent=1 // pred_check
      _
    $region31: #{actor_forward.1} parent=1 // pred_check_branch
      %55 = sbr.rel (0) target = $region33
    $region32: #{actor_forward.1} parent=1 // pred_region
      %56 = dma.done [#allocation3], 128
    $region33: #{actor_forward.1} parent=1 // pred_fallthru
      _
    // Predicated region
    $region34: #{actor_forward.1} parent=1 // pred_check
      _
    $region35: #{actor_forward.1} parent=1 // pred_check_branch
      %58 = sbr.rel (0) target = $region37
    $region36: #{actor_forward.1} parent=1 // pred_region
      %59 = dma.done [#allocation5], 16
    $region37: #{actor_forward.1} parent=1 // pred_fallthru
      _
    // Predicated region
    $region38: #{actor_forward.1} parent=1 // pred_check
      _
    $region39: #{actor_forward.1} parent=1 // pred_check_branch
      %61 = sbr.rel (0) target = $region41
    $region40: #{actor_forward.1} parent=1 // pred_region
      %62 = dma.done [#allocation5], 16
    $region41: #{actor_forward.1} parent=1 // pred_fallthru
      _
    %v64 = vld [vmem:[%s0] sm:$0xf]
    %v65 = vld [vmem:[%s0 + $0x4] sm:$0xf]
    %v66 = vld [vmem:[#allocation2] sm:$0xf]
    %v67 = vld [vmem:[#allocation2 + $0x4] sm:$0xf]
    %v68 = vld [vmem:[#allocation4] sm:$0x1]
    %v70 = vlaneseq
    %v71 = vshrl.u32 %v70, 7
    %v72 = vsub.s32 0, %v71
    %v73 = vrot.slane %v68, %v72
    %v77 = vunpack.c.l.b16 %v64
    %v78 = vunpack.c.l.b16 %v65
    %v79 = vpack.c.b16 %v78, %v77
    %v82 = vunpack.c.l.b16 %v66
    %v83 = vunpack.c.l.b16 %v67
    %v84 = vpack.c.b16 %v83, %v82
    %vm86 = vcmask 130048
    %v88 = vsel %vm86, %v79, 0
    %90 = vmatprep.subr.bf16.mxu0 0
    %91 = vmatpush1.bf16.msra.mxu0 %v84
    %92 = vmatprep.subr.bf16.mxu0 0
    %93 = vmatpush1.bf16.msra.mxu0 0
    %94 = vmatprep.subr.bf16.mxu0 0
    %95 = vmatpush1.bf16.msra.mxu0 0
    %96 = vmatprep.subr.bf16.mxu0 0
    %97 = vmatpush1.bf16.msra.mxu0 0
    %98 = vmatprep.subr.bf16.mxu0 0
    %99 = vmatpush1.bf16.msra.mxu0 0
    %100 = vmatprep.subr.bf16.mxu0 0
    %101 = vmatpush1.bf16.msra.mxu0 0
    %102 = vmatprep.subr.bf16.mxu0 0
    %103 = vmatpush1.bf16.msra.mxu0 0
    %104 = vmatprep.subr.bf16.mxu0 0
    %105 = vmatpush1.bf16.msra.mxu0 0
    %106 = vmatprep.subr.bf16.mxu0 0
    %107 = vmatpush1.bf16.msra.mxu0 0
    %108 = vmatprep.subr.bf16.mxu0 0
    %109 = vmatpush1.bf16.msra.mxu0 0
    %110 = vmatprep.subr.bf16.mxu0 0
    %111 = vmatpush1.bf16.msra.mxu0 0
    %112 = vmatprep.subr.bf16.mxu0 0
    %113 = vmatpush1.bf16.msra.mxu0 0
    %114 = vmatprep.subr.bf16.mxu0 0
    %115 = vmatpush1.bf16.msra.mxu0 0
    %116 = vmatprep.subr.bf16.mxu0 0
    %117 = vmatpush1.bf16.msra.mxu0 0
    %118 = vmatprep.subr.bf16.mxu0 0
    %119 = vmatpush1.bf16.msra.mxu0 0
    %120 = vmatprep.subr.bf16.mxu0 0
    %121 = vmatpush1.bf16.msra.mxu0 0
    %122 = vmatprep.mubr.bf16.mxu0 0
    %123 = vmatmul.mubr.bf16.gmra.mrb[0].mxu0 %v88
    %v124 = vpop.f32.mrb[0].mxu0
    %v125 = vadd.f32 %v73, %v124
    %v126 = vpop.f32.mrb[0].mxu0
    %v127 = vpop.f32.mrb[0].mxu0
    %v128 = vadd.f32 %v73, %v127
    %v129 = vpop.f32.mrb[0].mxu0
    %130 = vdwg.mxu0
    %v131 = vmax.f32 %v125, 0.0
    %v132 = vmax.f32 %v128, 0.0
    %v133 = vpack.c.bf16 %v132, %v131
    %v134 = vld [vmem:[%s3] sm:$0xf]
    %v135 = vld [vmem:[%s3 + $0x4] sm:$0xf]
    %v136 = vld [vmem:[%s3 + $0x8] sm:$0xf]
    %v137 = vld [vmem:[%s3 + $0xc] sm:$0xf]
    %v138 = vld [vmem:[#allocation6] sm:$0x1]
    %v140 = vlaneseq
    %v141 = vshrl.u32 %v140, 7
    %v142 = vsub.s32 0, %v141
    %v143 = vrot.slane %v138, %v142
    %v149 = vunpack.c.l.b16 %v134
    %v150 = vunpack.c.l.b16 %v135
    %v151 = vunpack.c.l.b16 %v136
    %v152 = vunpack.c.l.b16 %v137
    %v153 = vpack.c.b16 %v150, %v149
    %v154 = vpack.c.b16 %v152, %v151
    %vm157 = vcmask 261120
    %v159 = vsel %vm157, %v133, 0
    %161 = vmatprep.subr.bf16.mxu0 0
    %162 = vmatpush1.bf16.msra.mxu0 %v153
    %163 = vmatprep.subr.bf16.mxu0 0
    %164 = vmatpush1.bf16.msra.mxu0 %v154
    %165 = vmatprep.subr.bf16.mxu0 0
    %166 = vmatpush1.bf16.msra.mxu0 0
    %167 = vmatprep.subr.bf16.mxu0 0
    %168 = vmatpush1.bf16.msra.mxu0 0
    %169 = vmatprep.subr.bf16.mxu0 0
    %170 = vmatpush1.bf16.msra.mxu0 0
    %171 = vmatprep.subr.bf16.mxu0 0
    %172 = vmatpush1.bf16.msra.mxu0 0
    %173 = vmatprep.subr.bf16.mxu0 0
    %174 = vmatpush1.bf16.msra.mxu0 0
    %175 = vmatprep.subr.bf16.mxu0 0
    %176 = vmatpush1.bf16.msra.mxu0 0
    %177 = vmatprep.subr.bf16.mxu0 0
    %178 = vmatpush1.bf16.msra.mxu0 0
    %179 = vmatprep.subr.bf16.mxu0 0
    %180 = vmatpush1.bf16.msra.mxu0 0
    %181 = vmatprep.subr.bf16.mxu0 0
    %182 = vmatpush1.bf16.msra.mxu0 0
    %183 = vmatprep.subr.bf16.mxu0 0
    %184 = vmatpush1.bf16.msra.mxu0 0
    %185 = vmatprep.subr.bf16.mxu0 0
    %186 = vmatpush1.bf16.msra.mxu0 0
    %187 = vmatprep.subr.bf16.mxu0 0
    %188 = vmatpush1.bf16.msra.mxu0 0
    %189 = vmatprep.subr.bf16.mxu0 0
    %190 = vmatpush1.bf16.msra.mxu0 0
    %191 = vmatprep.subr.bf16.mxu0 0
    %192 = vmatpush1.bf16.msra.mxu0 0
    %193 = vmatprep.mubr.bf16.mxu0 0
    %194 = vmatmul.mubr.bf16.gmra.mrb[0].mxu0 %v159
    %v195 = vpop.f32.mrb[0].mxu0
    %v196 = vadd.f32 %v143, %v195
    %v197 = vpop.f32.mrb[0].mxu0
    %v198 = vpop.f32.mrb[0].mxu0
    %v199 = vadd.f32 %v143, %v198
    %v200 = vpop.f32.mrb[0].mxu0
    %201 = vdwg.mxu0
    %v202 = vmax.f32 %v196, 0.0
    %v203 = vmax.f32 %v199, 0.0
    %v204 = vpack.c.bf16 %v203, %v202
    %v205 = vld [vmem:[%s5] sm:$0xf]
    %v206 = vld [vmem:[%s5 + $0x4] sm:$0xf]
    %v207 = vld [vmem:[%s5 + $0x8] sm:$0xf]
    %v208 = vld [vmem:[%s5 + $0xc] sm:$0xf]
    %v209 = vld [vmem:[%s6] sm:$0x1]
    %v211 = vlaneseq
    %v212 = vshrl.u32 %v211, 7
    %v213 = vsub.s32 0, %v212
    %v214 = vrot.slane %v209, %v213
    %v220 = vunpack.c.l.b16 %v205
    %v221 = vunpack.c.l.b16 %v206
    %v222 = vunpack.c.l.b16 %v207
    %v223 = vunpack.c.l.b16 %v208
    %v224 = vpack.c.b16 %v221, %v220
    %v225 = vpack.c.b16 %v223, %v222
    %v229 = vsel %vm157, %v204, 0
    %231 = vmatprep.subr.bf16.mxu0 0
    %232 = vmatpush1.bf16.msra.mxu0 %v224
    %233 = vmatprep.subr.bf16.mxu0 0
    %234 = vmatpush1.bf16.msra.mxu0 %v225
    %235 = vmatprep.subr.bf16.mxu0 0
    %236 = vmatpush1.bf16.msra.mxu0 0
    %237 = vmatprep.subr.bf16.mxu0 0
    %238 = vmatpush1.bf16.msra.mxu0 0
    %239 = vmatprep.subr.bf16.mxu0 0
    %240 = vmatpush1.bf16.msra.mxu0 0
    %241 = vmatprep.subr.bf16.mxu0 0
    %242 = vmatpush1.bf16.msra.mxu0 0
    %243 = vmatprep.subr.bf16.mxu0 0
    %244 = vmatpush1.bf16.msra.mxu0 0
    %245 = vmatprep.subr.bf16.mxu0 0
    %246 = vmatpush1.bf16.msra.mxu0 0
    %247 = vmatprep.subr.bf16.mxu0 0
    %248 = vmatpush1.bf16.msra.mxu0 0
    %249 = vmatprep.subr.bf16.mxu0 0
    %250 = vmatpush1.bf16.msra.mxu0 0
    %251 = vmatprep.subr.bf16.mxu0 0
    %252 = vmatpush1.bf16.msra.mxu0 0
    %253 = vmatprep.subr.bf16.mxu0 0
    %254 = vmatpush1.bf16.msra.mxu0 0
    %255 = vmatprep.subr.bf16.mxu0 0
    %256 = vmatpush1.bf16.msra.mxu0 0
    %257 = vmatprep.subr.bf16.mxu0 0
    %258 = vmatpush1.bf16.msra.mxu0 0
    %259 = vmatprep.subr.bf16.mxu0 0
    %260 = vmatpush1.bf16.msra.mxu0 0
    %261 = vmatprep.subr.bf16.mxu0 0
    %262 = vmatpush1.bf16.msra.mxu0 0
    %263 = vmatprep.mubr.bf16.mxu0 0
    %264 = vmatmul.mubr.bf16.gmra.mrb[0].mxu0 %v229
    %v265 = vpop.f32.mrb[0].mxu0
    %v266 = vadd.f32 %v214, %v265
    %v267 = vpop.f32.mrb[0].mxu0
    %v268 = vpop.f32.mrb[0].mxu0
    %v269 = vadd.f32 %v214, %v268
    %v270 = vpop.f32.mrb[0].mxu0
    %271 = vdwg.mxu0
    %272 = vmax.xlane.f32.xlu0 %v266
    %v273 = vpop.xlane.xlu0 %272
    %274 = vmax.xlane.f32.xlu0 %v269
    %v275 = vpop.xlane.xlu0 %274
    %v276 = vsub.f32 %v266, %v273
    %v277 = vsub.f32 %v269, %v275
    %v278 = vmul.f32 %v276, 1.442695
    %v279 = vpow.pop %v278
    %v280 = vmul.f32 %v277, 1.442695
    %v281 = vpow.pop %v280
    %282 = vadd.xlane.f32.xlu0 %v279
    %v283 = vpop.xlane.xlu0 %282
    %284 = vadd.xlane.f32.xlu0 %v281
    %v285 = vpop.xlane.xlu0 %284
    %v286 = vrcp.pop %v283
    %v287 = vmul.f32 %v279, %v286
    %v288 = vrcp.pop %v285
    %v289 = vmul.f32 %v281, %v288
    %290 = vst [vmem:[%s7] sm:$0xff] %v287
    %291 = vst [vmem:[%s7 + $0x8] sm:$0xff] %v289
    // Predicated region
    $region42: #{actor_forward.1} parent=1 // pred_check
      _
    $region43: #{actor_forward.1} parent=1 // pred_check_branch
      %293 = sbr.rel (0) target = $region45
    $region44: #{actor_forward.1} parent=1 // pred_region
      _
    $region45: #{actor_forward.1} parent=1 // pred_fallthru
      _
    // Predicated region
    $region46: #{actor_forward.1} parent=1 // pred_check
      _
    $region47: #{actor_forward.1} parent=1 // pred_check_branch
      %295 = sbr.rel (0) target = $region49
    $region48: #{actor_forward.1} parent=1 // pred_region
      _
    $region49: #{actor_forward.1} parent=1 // pred_fallthru
      _
    %296 = vsyncpa [#allocation3], 1
    %297 = vsyncpa [#allocation5], 1

</llo_original>
